<compile_context>
chip_gen: v7x
topology: tpu7x:2x2x1
jax: 0.10.0
libtpu: 0.0.40
codegen_flags: <defaults>
</compile_context>

<pallas_src>
import functools
import math

import jax
import jax.numpy as jnp
from jax import lax
from jax.experimental import pallas as pl
from jax.experimental.pallas import tpu as pltpu


def attn_lstm_cell_kernel(
    hc_ref,      # (B, 2H) f32 : [h_t | c]
    hhat_ref,    # (S, D)  f32 : attention memory (PyTorch (S,1,D) squeezed)
    x_ref,       # (B, I)  f32 : inf_inputs
    w_h_ref,     # (H, 4H+D)  bf16 : [Wh | Wq]        (shared left operand h_t)
    w_kv_ref,    # (D, 2D)    bf16 : [Wk | Wv]        (shared left operand hhat)
    w_oz_ref,    # (D, D+3Z)  bf16 : [Wo | w_hh | w_hx | w_hb]
    w_g_ref,     # (3Z+I, 4H) bf16 : [W_hz ; W_xz ; b ; Wx]
    bias_ref,    # (6, L) f32 : packed biases / LayerNorm params (see pack_params)
    out_ref,     # (B, 2H) f32 : [new_h | new_c]      (aliases hc)
    *, H, D, Z, I, eps,
):
    f32 = jnp.float32
    bf16 = jnp.bfloat16

    hc = hc_ref[...]
    h_t = hc[:, :H]
    c = hc[:, H:2 * H]
    hhat = hhat_ref[...]
    x = x_ref[...]
    bias = bias_ref[...]

    # ---- fused h_t matmul: [Wh(h_t) | q_proj(h_t)] in one MXU push ----------
    qwh = jnp.dot(h_t.astype(bf16), w_h_ref[...], preferred_element_type=f32)
    wh_h = qwh[:, :4 * H] + bias[0:1, :4 * H]          # Wh(h_t) + Wh_b  (B,4H)
    q = qwh[:, 4 * H:4 * H + D] + bias[1:2, 0:D]       # q projection    (B,D)

    # ---- fused hhat matmul: [k | v] ------------------------------------------
    kv = jnp.dot(hhat.astype(bf16), w_kv_ref[...], preferred_element_type=f32)
    k = kv[:, :D] + bias[1:2, D:2 * D]                 # (S, D)
    v = kv[:, D:2 * D] + bias[1:2, 2 * D:3 * D]        # (S, D)

    # ---- single-head scaled-dot-product attention (N=1) ---------------------
    scores = lax.dot_general(q, k, (((1,), (1,)), ((), ())),
                             preferred_element_type=f32) * (1.0 / math.sqrt(D))
    scores = scores - jnp.max(scores, axis=-1, keepdims=True)
    p = jnp.exp(scores)
    p = p * pl.reciprocal(jnp.sum(p, axis=-1, keepdims=True), approx=True)
    ctx = jnp.dot(p, v, preferred_element_type=f32)     # (B, D)

    # ---- attention out-proj and the three z projections ---------------------
    w_oz = w_oz_ref[...]
    z_t = jnp.dot(ctx.astype(bf16), w_oz[:, :D],
                  preferred_element_type=f32) + bias[1:2, 3 * D:4 * D]
    zs = jnp.dot(z_t.astype(bf16), w_oz[:, D:D + 3 * Z],
                 preferred_element_type=f32) + bias[2:3, :3 * Z]   # [z_h|z_x|z_b]

    # ---- gate pre-activations ------------------------------------------------
    w_g = w_g_ref[...]
    d_z_h = jnp.dot(zs[:, 0:Z].astype(bf16), w_g[0:Z],
                    preferred_element_type=f32)
    d_z_x = jnp.dot(zs[:, Z:2 * Z].astype(bf16), w_g[Z:2 * Z],
                    preferred_element_type=f32)
    b_z_b = jnp.dot(zs[:, 2 * Z:3 * Z].astype(bf16), w_g[2 * Z:3 * Z],
                    preferred_element_type=f32) + bias[3:4, :4 * H]
    wx_x = jnp.dot(x.astype(bf16), w_g[3 * Z:3 * Z + I],
                   preferred_element_type=f32) + bias[4:5, :4 * H]

    ifgo = d_z_h * wh_h + d_z_x * wx_x + b_z_b          # (B, 4H), lane-dense

    # sigmoid/tanh on the full tile (EUP), blended by an iota lane mask, then
    # static gate slices (the (B,H) extraction is needed to combine with c).
    lane = lax.broadcasted_iota(jnp.int32, ifgo.shape, 1)
    is_g = (lane >= 2 * H) & (lane < 3 * H)
    gates = jnp.where(is_g, jnp.tanh(ifgo), jax.nn.sigmoid(ifgo))

    i_g = gates[:, 0 * H:1 * H]
    f_g = gates[:, 1 * H:2 * H]
    g_g = gates[:, 2 * H:3 * H]
    o_g = gates[:, 3 * H:4 * H]

    new_c = f_g * c + i_g * g_g
    new_h = o_g * jnp.tanh(new_c)
    # Dropout(p=0.1) -> identity (inference mode).

    def layer_norm(y, gamma, beta):
        mu = jnp.mean(y, axis=-1, keepdims=True)
        var = jnp.mean((y - mu) * (y - mu), axis=-1, keepdims=True)
        return (y - mu) * lax.rsqrt(var + eps) * gamma + beta

    new_h = layer_norm(new_h, bias[5:6, 0:H], bias[5:6, H:2 * H])
    new_c = layer_norm(new_c, bias[5:6, 2 * H:3 * H], bias[5:6, 3 * H:4 * H])

    # single lane-denser (B, 2H) store, aliased in place over [h_t|c]
    out_ref[...] = jnp.concatenate([new_h, new_c], axis=-1).astype(out_ref.dtype)


def init_params(key, z_dim, input_dim, hidden_hat_dim, hidden_dim):
    """Synthetic per-layer parameters. Linear weights stored as (in, out)."""
    D, H, Z, I = hidden_hat_dim, hidden_dim, z_dim, input_dim
    h4 = 4 * H

    def nxt():
        nonlocal key
        key, sub = jax.random.split(key)
        return sub

    def w(shape, s=0.1):
        return s * jax.random.normal(nxt(), shape, dtype=jnp.float32)

    def b(n, s=0.05):
        return s * jax.random.normal(nxt(), (n,), dtype=jnp.float32)

    return dict(
        # MultiheadAttention(embed_dim=D, num_heads=1): split in_proj + out_proj
        Wq_w=w((D, D)), Wq_b=b(D),
        Wk_w=w((D, D)), Wk_b=b(D),
        Wv_w=w((D, D)), Wv_b=b(D),
        Wo_w=w((D, D)), Wo_b=b(D),
        # w_hh / w_hx / w_hb : D -> Z
        w_hh_w=w((D, Z)), w_hh_b=b(Z),
        w_hx_w=w((D, Z)), w_hx_b=b(Z),
        w_hb_w=w((D, Z)), w_hb_b=b(Z),
        # W_hz / W_xz (no bias), b : Z -> 4H
        W_hz_w=w((Z, h4)),
        W_xz_w=w((Z, h4)),
        b_w=w((Z, h4)), b_b=b(h4),
        # Wh : H -> 4H ; Wx : I -> 4H
        Wh_w=w((H, h4)), Wh_b=b(h4),
        Wx_w=w((I, h4)), Wx_b=b(h4),
        # LayerNorm norm_h / norm_c
        nh_g=jnp.ones((H,), jnp.float32), nh_b=jnp.zeros((H,), jnp.float32),
        nc_g=jnp.ones((H,), jnp.float32), nc_b=jnp.zeros((H,), jnp.float32),
    )


def pack_params(p, z_dim, input_dim, hidden_hat_dim, hidden_dim):
    """Host-side consolidation: 26 per-layer tensors -> 5 kernel operands."""
    D, H, Z, I = hidden_hat_dim, hidden_dim, z_dim, input_dim
    bf16 = jnp.bfloat16

    w_h = jnp.concatenate([p["Wh_w"], p["Wq_w"]], axis=1).astype(bf16)    # (H, 4H+D)
    w_kv = jnp.concatenate([p["Wk_w"], p["Wv_w"]], axis=1).astype(bf16)   # (D, 2D)
    w_oz = jnp.concatenate(
        [p["Wo_w"], p["w_hh_w"], p["w_hx_w"], p["w_hb_w"]], axis=1).astype(bf16)  # (D, D+3Z)
    w_g = jnp.concatenate(
        [p["W_hz_w"], p["W_xz_w"], p["b_w"], p["Wx_w"]], axis=0).astype(bf16)     # (3Z+I, 4H)

    L = max(4 * H, 4 * D, 3 * Z)
    L = ((L + 127) // 128) * 128     # lane-align the packed bias rows

    def row(*parts):
        r = jnp.concatenate(parts)
        return jnp.pad(r, (0, L - r.shape[0]))

    bias = jnp.stack([
        row(p["Wh_b"]),                                        # row 0: Wh bias          (4H)
        row(p["Wq_b"], p["Wk_b"], p["Wv_b"], p["Wo_b"]),       # row 1: attention biases (4D)
        row(p["w_hh_b"], p["w_hx_b"], p["w_hb_b"]),            # row 2: z-proj biases    (3Z)
        row(p["b_b"]),                                         # row 3: b bias           (4H)
        row(p["Wx_b"]),                                        # row 4: Wx bias          (4H)
        row(p["nh_g"], p["nh_b"], p["nc_g"], p["nc_b"]),       # row 5: LayerNorm params (4H)
    ]).astype(jnp.float32)

    return w_h, w_kv, w_oz, w_g, bias


@functools.partial(
    jax.jit,
    static_argnames=("z_dim", "input_dim", "hidden_hat_dim", "hidden_dim"))
def attn_inference_net_lstm_cell(h_t, c, h_t_hat, inf_inputs, packed, *,
                                 z_dim, input_dim, hidden_hat_dim, hidden_dim):
    D, H = hidden_hat_dim, hidden_dim
    # Module is only well-defined when the attention query (h_t) width matches
    # embed_dim, and h_t_hat follows PyTorch's (S, N=1, E) layout.
    assert H == D, "AttnInferenceNetLSTMCell requires hidden_dim == hidden_hat_dim"
    assert h_t_hat.ndim == 3 and h_t_hat.shape[1] == 1 and h_t_hat.shape[2] == D

    S = h_t_hat.shape[0]
    B = h_t.shape[0]
    hhat = h_t_hat.reshape(S, D)
    hc = jnp.concatenate([h_t, c], axis=-1)             # (B, 2H) state buffer

    w_h, w_kv, w_oz, w_g, bias = packed
    kernel = functools.partial(
        attn_lstm_cell_kernel, H=H, D=D, Z=z_dim, I=input_dim, eps=1e-5)
    vmem = pl.BlockSpec(memory_space=pltpu.MemorySpace.VMEM)

    new_hc = pl.pallas_call(
        kernel,
        out_shape=jax.ShapeDtypeStruct((B, 2 * H), jnp.float32),
        in_specs=[vmem] * 8,
        out_specs=vmem,
        input_output_aliases={0: 0},                     # write new state over [h_t|c]
    )(hc, hhat, inf_inputs, w_h, w_kv, w_oz, w_g, bias)

    return new_hc[:, :H], new_hc[:, H:]


if __name__ == "__main__":
    # Small shapes consistent with the module's forward.
    z_dim = 16
    input_dim = 24
    hidden_hat_dim = 32
    hidden_dim = 32          # must equal hidden_hat_dim (attention query = h_t)
    B = 4                    # batch (becomes L in MHA with N=1)
    S = 8                    # memory length of h_t_hat

    key = jax.random.PRNGKey(0)
    kp, kh, kc, khh, kx = jax.random.split(key, 5)

    raw_params = init_params(kp, z_dim, input_dim, hidden_hat_dim, hidden_dim)
    packed = pack_params(raw_params, z_dim, input_dim, hidden_hat_dim, hidden_dim)

    h_t = jax.random.normal(kh, (B, hidden_dim), dtype=jnp.float32)
    c = jax.random.normal(kc, (B, hidden_dim), dtype=jnp.float32)
    h_t_hat = jax.random.normal(khh, (S, 1, hidden_hat_dim), dtype=jnp.float32)
    inf_inputs = jax.random.normal(kx, (B, input_dim), dtype=jnp.float32)

    new_h, new_c = attn_inference_net_lstm_cell(
        h_t, c, h_t_hat, inf_inputs, packed,
        z_dim=z_dim, input_dim=input_dim,
        hidden_hat_dim=hidden_hat_dim, hidden_dim=hidden_dim)
    jax.block_until_ready((new_h, new_c))

    assert new_h.shape == (B, hidden_dim) and new_c.shape == (B, hidden_dim)
    assert bool(jnp.all(jnp.isfinite(new_h))) and bool(jnp.all(jnp.isfinite(new_c)))
    print("KERNEL_OK")
</pallas_src>

<mosaic_0001>
module attributes {stable_mosaic.version = 11 : i64} {
  func.func @attn_lstm_cell_kernel(%arg0: memref<4x64xf32, #tpu.memory_space<vmem>>, %arg1: memref<8x32xf32, #tpu.memory_space<vmem>>, %arg2: memref<4x24xf32, #tpu.memory_space<vmem>>, %arg3: memref<32x160xbf16, #tpu.memory_space<vmem>>, %arg4: memref<32x64xbf16, #tpu.memory_space<vmem>>, %arg5: memref<32x80xbf16, #tpu.memory_space<vmem>>, %arg6: memref<72x128xbf16, #tpu.memory_space<vmem>>, %arg7: memref<6x128xf32, #tpu.memory_space<vmem>>, %arg8: memref<4x64xf32, #tpu.memory_space<vmem>>) attributes {dimension_semantics = [], scalar_prefetch = 0 : i64, scratch_operands = 0 : i64, tpu.core_type = #tpu.core_type<tc>} {
    %c0 = arith.constant 0 : index
    %c0_0 = arith.constant 0 : index
    %0 = vector.load %arg0[%c0, %c0_0] : memref<4x64xf32, #tpu.memory_space<vmem>>, vector<4x64xf32>
    %1 = vector.extract_strided_slice %0 {offsets = [0, 0], sizes = [4, 32], strides = [1, 1]} : vector<4x64xf32> to vector<4x32xf32>
    %2 = vector.extract_strided_slice %0 {offsets = [0, 32], sizes = [4, 32], strides = [1, 1]} : vector<4x64xf32> to vector<4x32xf32>
    %c0_1 = arith.constant 0 : index
    %c0_2 = arith.constant 0 : index
    %3 = vector.load %arg1[%c0_1, %c0_2] : memref<8x32xf32, #tpu.memory_space<vmem>>, vector<8x32xf32>
    %c0_3 = arith.constant 0 : index
    %c0_4 = arith.constant 0 : index
    %4 = vector.load %arg2[%c0_3, %c0_4] : memref<4x24xf32, #tpu.memory_space<vmem>>, vector<4x24xf32>
    %c0_5 = arith.constant 0 : index
    %c0_6 = arith.constant 0 : index
    %5 = vector.load %arg7[%c0_5, %c0_6] : memref<6x128xf32, #tpu.memory_space<vmem>>, vector<6x128xf32>
    %6 = arith.truncf %1 : vector<4x32xf32> to vector<4x32xbf16>
    %c0_7 = arith.constant 0 : index
    %c0_8 = arith.constant 0 : index
    %7 = vector.load %arg3[%c0_7, %c0_8] : memref<32x160xbf16, #tpu.memory_space<vmem>>, vector<32x160xbf16>
    %cst = arith.constant dense<0.000000e+00> : vector<4x160xf32>
    %8 = tpu.matmul %6, %7, %cst {dimension_numbers = #tpu.dot_dimension_numbers<[1], [0], [0], [1], [0, 0, 1, 1], [], []>} : vector<4x32xbf16>, vector<32x160xbf16>, vector<4x160xf32> -> vector<4x160xf32>
    %9 = vector.extract_strided_slice %8 {offsets = [0, 0], sizes = [4, 128], strides = [1, 1]} : vector<4x160xf32> to vector<4x128xf32>
    %10 = vector.extract_strided_slice %5 {offsets = [0, 0], sizes = [1, 128], strides = [1, 1]} : vector<6x128xf32> to vector<1x128xf32>
    %11 = vector.broadcast %10 : vector<1x128xf32> to vector<4x128xf32>
    %12 = arith.addf %9, %11 : vector<4x128xf32>
    %13 = vector.extract_strided_slice %8 {offsets = [0, 128], sizes = [4, 32], strides = [1, 1]} : vector<4x160xf32> to vector<4x32xf32>
    %14 = vector.extract_strided_slice %5 {offsets = [1, 0], sizes = [1, 32], strides = [1, 1]} : vector<6x128xf32> to vector<1x32xf32>
    %15 = vector.broadcast %14 : vector<1x32xf32> to vector<4x32xf32>
    %16 = arith.addf %13, %15 : vector<4x32xf32>
    %17 = arith.truncf %3 : vector<8x32xf32> to vector<8x32xbf16>
    %c0_9 = arith.constant 0 : index
    %c0_10 = arith.constant 0 : index
    %18 = vector.load %arg4[%c0_9, %c0_10] : memref<32x64xbf16, #tpu.memory_space<vmem>>, vector<32x64xbf16>
    %cst_11 = arith.constant dense<0.000000e+00> : vector<8x64xf32>
    %19 = tpu.matmul %17, %18, %cst_11 {dimension_numbers = #tpu.dot_dimension_numbers<[1], [0], [0], [1], [0, 0, 1, 1], [], []>} : vector<8x32xbf16>, vector<32x64xbf16>, vector<8x64xf32> -> vector<8x64xf32>
    %20 = vector.extract_strided_slice %19 {offsets = [0, 0], sizes = [8, 32], strides = [1, 1]} : vector<8x64xf32> to vector<8x32xf32>
    %21 = vector.extract_strided_slice %5 {offsets = [1, 32], sizes = [1, 32], strides = [1, 1]} : vector<6x128xf32> to vector<1x32xf32>
    %22 = vector.broadcast %21 : vector<1x32xf32> to vector<8x32xf32>
    %23 = arith.addf %20, %22 : vector<8x32xf32>
    %24 = vector.extract_strided_slice %19 {offsets = [0, 32], sizes = [8, 32], strides = [1, 1]} : vector<8x64xf32> to vector<8x32xf32>
    %25 = vector.extract_strided_slice %5 {offsets = [1, 64], sizes = [1, 32], strides = [1, 1]} : vector<6x128xf32> to vector<1x32xf32>
    %26 = vector.broadcast %25 : vector<1x32xf32> to vector<8x32xf32>
    %27 = arith.addf %24, %26 : vector<8x32xf32>
    %cst_12 = arith.constant dense<0.000000e+00> : vector<4x8xf32>
    %28 = tpu.matmul %16, %23, %cst_12 {dimension_numbers = #tpu.dot_dimension_numbers<[1], [1], [0], [0], [0, 0, 1, 0], [], []>} : vector<4x32xf32>, vector<8x32xf32>, vector<4x8xf32> -> vector<4x8xf32>
    %cst_13 = arith.constant 0.176776692 : f32
    %29 = vector.broadcast %cst_13 : f32 to vector<4x8xf32>
    %30 = arith.mulf %28, %29 : vector<4x8xf32>
    %cst_14 = arith.constant dense<0xFF800000> : vector<4xf32>
    %31 = vector.multi_reduction <maximumf>, %30, %cst_14 [1] : vector<4x8xf32> to vector<4xf32>
    %32 = vector.shape_cast %31 : vector<4xf32> to vector<4x1xf32>
    %33 = vector.broadcast %32 : vector<4x1xf32> to vector<4x8xf32>
    %34 = arith.subf %30, %33 : vector<4x8xf32>
    %35 = math.exp %34 : vector<4x8xf32>
    %cst_15 = arith.constant dense<0.000000e+00> : vector<4xf32>
    %36 = vector.multi_reduction <add>, %35, %cst_15 [1] : vector<4x8xf32> to vector<4xf32>
    %37 = vector.shape_cast %36 : vector<4xf32> to vector<4x1xf32>
    %38 = tpu.reciprocal %37 {approx = true} : vector<4x1xf32> -> vector<4x1xf32>
    %39 = vector.broadcast %38 : vector<4x1xf32> to vector<4x8xf32>
    %40 = arith.mulf %35, %39 : vector<4x8xf32>
    %cst_16 = arith.constant dense<0.000000e+00> : vector<4x32xf32>
    %41 = tpu.matmul %40, %27, %cst_16 {dimension_numbers = #tpu.dot_dimension_numbers<[1], [0], [0], [1], [0, 0, 1, 1], [], []>} : vector<4x8xf32>, vector<8x32xf32>, vector<4x32xf32> -> vector<4x32xf32>
    %c0_17 = arith.constant 0 : index
    %c0_18 = arith.constant 0 : index
    %42 = vector.load %arg5[%c0_17, %c0_18] : memref<32x80xbf16, #tpu.memory_space<vmem>>, vector<32x80xbf16>
    %43 = arith.truncf %41 : vector<4x32xf32> to vector<4x32xbf16>
    %44 = vector.extract_strided_slice %42 {offsets = [0, 0], sizes = [32, 32], strides = [1, 1]} : vector<32x80xbf16> to vector<32x32xbf16>
    %cst_19 = arith.constant dense<0.000000e+00> : vector<4x32xf32>
    %45 = tpu.matmul %43, %44, %cst_19 {dimension_numbers = #tpu.dot_dimension_numbers<[1], [0], [0], [1], [0, 0, 1, 1], [], []>} : vector<4x32xbf16>, vector<32x32xbf16>, vector<4x32xf32> -> vector<4x32xf32>
    %46 = vector.extract_strided_slice %5 {offsets = [1, 96], sizes = [1, 32], strides = [1, 1]} : vector<6x128xf32> to vector<1x32xf32>
    %47 = vector.broadcast %46 : vector<1x32xf32> to vector<4x32xf32>
    %48 = arith.addf %45, %47 : vector<4x32xf32>
    %49 = arith.truncf %48 : vector<4x32xf32> to vector<4x32xbf16>
    %50 = vector.extract_strided_slice %42 {offsets = [0, 32], sizes = [32, 48], strides = [1, 1]} : vector<32x80xbf16> to vector<32x48xbf16>
    %cst_20 = arith.constant dense<0.000000e+00> : vector<4x48xf32>
    %51 = tpu.matmul %49, %50, %cst_20 {dimension_numbers = #tpu.dot_dimension_numbers<[1], [0], [0], [1], [0, 0, 1, 1], [], []>} : vector<4x32xbf16>, vector<32x48xbf16>, vector<4x48xf32> -> vector<4x48xf32>
    %52 = vector.extract_strided_slice %5 {offsets = [2, 0], sizes = [1, 48], strides = [1, 1]} : vector<6x128xf32> to vector<1x48xf32>
    %53 = vector.broadcast %52 : vector<1x48xf32> to vector<4x48xf32>
    %54 = arith.addf %51, %53 : vector<4x48xf32>
    %c0_21 = arith.constant 0 : index
    %c0_22 = arith.constant 0 : index
    %55 = vector.load %arg6[%c0_21, %c0_22] : memref<72x128xbf16, #tpu.memory_space<vmem>>, vector<72x128xbf16>
    %56 = vector.extract_strided_slice %54 {offsets = [0, 0], sizes = [4, 16], strides = [1, 1]} : vector<4x48xf32> to vector<4x16xf32>
    %57 = arith.truncf %56 : vector<4x16xf32> to vector<4x16xbf16>
    %58 = vector.extract_strided_slice %55 {offsets = [0, 0], sizes = [16, 128], strides = [1, 1]} : vector<72x128xbf16> to vector<16x128xbf16>
    %cst_23 = arith.constant dense<0.000000e+00> : vector<4x128xf32>
    %59 = tpu.matmul %57, %58, %cst_23 {dimension_numbers = #tpu.dot_dimension_numbers<[1], [0], [0], [1], [0, 0, 1, 1], [], []>} : vector<4x16xbf16>, vector<16x128xbf16>, vector<4x128xf32> -> vector<4x128xf32>
    %60 = vector.extract_strided_slice %54 {offsets = [0, 16], sizes = [4, 16], strides = [1, 1]} : vector<4x48xf32> to vector<4x16xf32>
    %61 = arith.truncf %60 : vector<4x16xf32> to vector<4x16xbf16>
    %62 = vector.extract_strided_slice %55 {offsets = [16, 0], sizes = [16, 128], strides = [1, 1]} : vector<72x128xbf16> to vector<16x128xbf16>
    %cst_24 = arith.constant dense<0.000000e+00> : vector<4x128xf32>
    %63 = tpu.matmul %61, %62, %cst_24 {dimension_numbers = #tpu.dot_dimension_numbers<[1], [0], [0], [1], [0, 0, 1, 1], [], []>} : vector<4x16xbf16>, vector<16x128xbf16>, vector<4x128xf32> -> vector<4x128xf32>
    %64 = vector.extract_strided_slice %54 {offsets = [0, 32], sizes = [4, 16], strides = [1, 1]} : vector<4x48xf32> to vector<4x16xf32>
    %65 = arith.truncf %64 : vector<4x16xf32> to vector<4x16xbf16>
    %66 = vector.extract_strided_slice %55 {offsets = [32, 0], sizes = [16, 128], strides = [1, 1]} : vector<72x128xbf16> to vector<16x128xbf16>
    %cst_25 = arith.constant dense<0.000000e+00> : vector<4x128xf32>
    %67 = tpu.matmul %65, %66, %cst_25 {dimension_numbers = #tpu.dot_dimension_numbers<[1], [0], [0], [1], [0, 0, 1, 1], [], []>} : vector<4x16xbf16>, vector<16x128xbf16>, vector<4x128xf32> -> vector<4x128xf32>
    %68 = vector.extract_strided_slice %5 {offsets = [3, 0], sizes = [1, 128], strides = [1, 1]} : vector<6x128xf32> to vector<1x128xf32>
    %69 = vector.broadcast %68 : vector<1x128xf32> to vector<4x128xf32>
    %70 = arith.addf %67, %69 : vector<4x128xf32>
    %71 = arith.truncf %4 : vector<4x24xf32> to vector<4x24xbf16>
    %72 = vector.extract_strided_slice %55 {offsets = [48, 0], sizes = [24, 128], strides = [1, 1]} : vector<72x128xbf16> to vector<24x128xbf16>
    %cst_26 = arith.constant dense<0.000000e+00> : vector<4x128xf32>
    %73 = tpu.matmul %71, %72, %cst_26 {dimension_numbers = #tpu.dot_dimension_numbers<[1], [0], [0], [1], [0, 0, 1, 1], [], []>} : vector<4x24xbf16>, vector<24x128xbf16>, vector<4x128xf32> -> vector<4x128xf32>
    %74 = vector.extract_strided_slice %5 {offsets = [4, 0], sizes = [1, 128], strides = [1, 1]} : vector<6x128xf32> to vector<1x128xf32>
    %75 = vector.broadcast %74 : vector<1x128xf32> to vector<4x128xf32>
    %76 = arith.addf %73, %75 : vector<4x128xf32>
    %77 = arith.mulf %59, %12 : vector<4x128xf32>
    %78 = arith.mulf %63, %76 : vector<4x128xf32>
    %79 = arith.addf %77, %78 : vector<4x128xf32>
    %80 = arith.addf %79, %70 : vector<4x128xf32>
    %81 = tpu.iota {dimensions = array<i32: 1>} : vector<4x128xi32>
    %c64_i32 = arith.constant 64 : i32
    %82 = vector.broadcast %c64_i32 : i32 to vector<4x128xi32>
    %83 = arith.cmpi sge, %81, %82 : vector<4x128xi32>
    %c96_i32 = arith.constant 96 : i32
    %84 = vector.broadcast %c96_i32 : i32 to vector<4x128xi32>
    %85 = arith.cmpi slt, %81, %84 : vector<4x128xi32>
    %86 = arith.andi %83, %85 : vector<4x128xi1>
    %87 = math.tanh %80 : vector<4x128xf32>
    %88 = arith.negf %80 : vector<4x128xf32>
    %89 = math.exp %88 : vector<4x128xf32>
    %cst_27 = arith.constant 1.000000e+00 : f32
    %90 = vector.broadcast %cst_27 : f32 to vector<4x128xf32>
    %91 = arith.addf %90, %89 : vector<4x128xf32>
    %92 = arith.divf %90, %91 : vector<4x128xf32>
    %93 = arith.select %86, %87, %92 : vector<4x128xi1>, vector<4x128xf32>
    %94 = vector.extract_strided_slice %93 {offsets = [0, 0], sizes = [4, 32], strides = [1, 1]} : vector<4x128xf32> to vector<4x32xf32>
    %95 = vector.extract_strided_slice %93 {offsets = [0, 32], sizes = [4, 32], strides = [1, 1]} : vector<4x128xf32> to vector<4x32xf32>
    %96 = vector.extract_strided_slice %93 {offsets = [0, 64], sizes = [4, 32], strides = [1, 1]} : vector<4x128xf32> to vector<4x32xf32>
    %97 = vector.extract_strided_slice %93 {offsets = [0, 96], sizes = [4, 32], strides = [1, 1]} : vector<4x128xf32> to vector<4x32xf32>
    %98 = arith.mulf %95, %2 : vector<4x32xf32>
    %99 = arith.mulf %94, %96 : vector<4x32xf32>
    %100 = arith.addf %98, %99 : vector<4x32xf32>
    %101 = math.tanh %100 : vector<4x32xf32>
    %102 = arith.mulf %97, %101 : vector<4x32xf32>
    %103 = vector.extract_strided_slice %5 {offsets = [5, 0], sizes = [1, 32], strides = [1, 1]} : vector<6x128xf32> to vector<1x32xf32>
    %104 = vector.extract_strided_slice %5 {offsets = [5, 32], sizes = [1, 32], strides = [1, 1]} : vector<6x128xf32> to vector<1x32xf32>
    %cst_28 = arith.constant dense<0.000000e+00> : vector<4xf32>
    %105 = vector.multi_reduction <add>, %102, %cst_28 [1] : vector<4x32xf32> to vector<4xf32>
    %106 = vector.shape_cast %105 : vector<4xf32> to vector<4x1xf32>
    %cst_29 = arith.constant 3.200000e+01 : f32
    %107 = vector.broadcast %cst_29 : f32 to vector<4x1xf32>
    %108 = arith.divf %106, %107 : vector<4x1xf32>
    %109 = vector.broadcast %108 : vector<4x1xf32> to vector<4x32xf32>
    %110 = arith.subf %102, %109 : vector<4x32xf32>
    %111 = vector.broadcast %108 : vector<4x1xf32> to vector<4x32xf32>
    %112 = arith.subf %102, %111 : vector<4x32xf32>
    %113 = arith.mulf %110, %112 : vector<4x32xf32>
    %cst_30 = arith.constant dense<0.000000e+00> : vector<4xf32>
    %114 = vector.multi_reduction <add>, %113, %cst_30 [1] : vector<4x32xf32> to vector<4xf32>
    %115 = vector.shape_cast %114 : vector<4xf32> to vector<4x1xf32>
    %cst_31 = arith.constant 3.200000e+01 : f32
    %116 = vector.broadcast %cst_31 : f32 to vector<4x1xf32>
    %117 = arith.divf %115, %116 : vector<4x1xf32>
    %118 = vector.broadcast %108 : vector<4x1xf32> to vector<4x32xf32>
    %119 = arith.subf %102, %118 : vector<4x32xf32>
    %cst_32 = arith.constant 9.99999974E-6 : f32
    %120 = vector.broadcast %cst_32 : f32 to vector<4x1xf32>
    %121 = arith.addf %117, %120 : vector<4x1xf32>
    %122 = math.rsqrt %121 : vector<4x1xf32>
    %123 = vector.broadcast %122 : vector<4x1xf32> to vector<4x32xf32>
    %124 = arith.mulf %119, %123 : vector<4x32xf32>
    %125 = vector.broadcast %103 : vector<1x32xf32> to vector<4x32xf32>
    %126 = arith.mulf %124, %125 : vector<4x32xf32>
    %127 = vector.broadcast %104 : vector<1x32xf32> to vector<4x32xf32>
    %128 = arith.addf %126, %127 : vector<4x32xf32>
    %129 = vector.extract_strided_slice %5 {offsets = [5, 64], sizes = [1, 32], strides = [1, 1]} : vector<6x128xf32> to vector<1x32xf32>
    %130 = vector.extract_strided_slice %5 {offsets = [5, 96], sizes = [1, 32], strides = [1, 1]} : vector<6x128xf32> to vector<1x32xf32>
    %cst_33 = arith.constant dense<0.000000e+00> : vector<4xf32>
    %131 = vector.multi_reduction <add>, %100, %cst_33 [1] : vector<4x32xf32> to vector<4xf32>
    %132 = vector.shape_cast %131 : vector<4xf32> to vector<4x1xf32>
    %cst_34 = arith.constant 3.200000e+01 : f32
    %133 = vector.broadcast %cst_34 : f32 to vector<4x1xf32>
    %134 = arith.divf %132, %133 : vector<4x1xf32>
    %135 = vector.broadcast %134 : vector<4x1xf32> to vector<4x32xf32>
    %136 = arith.subf %100, %135 : vector<4x32xf32>
    %137 = vector.broadcast %134 : vector<4x1xf32> to vector<4x32xf32>
    %138 = arith.subf %100, %137 : vector<4x32xf32>
    %139 = arith.mulf %136, %138 : vector<4x32xf32>
    %cst_35 = arith.constant dense<0.000000e+00> : vector<4xf32>
    %140 = vector.multi_reduction <add>, %139, %cst_35 [1] : vector<4x32xf32> to vector<4xf32>
    %141 = vector.shape_cast %140 : vector<4xf32> to vector<4x1xf32>
    %cst_36 = arith.constant 3.200000e+01 : f32
    %142 = vector.broadcast %cst_36 : f32 to vector<4x1xf32>
    %143 = arith.divf %141, %142 : vector<4x1xf32>
    %144 = vector.broadcast %134 : vector<4x1xf32> to vector<4x32xf32>
    %145 = arith.subf %100, %144 : vector<4x32xf32>
    %cst_37 = arith.constant 9.99999974E-6 : f32
    %146 = vector.broadcast %cst_37 : f32 to vector<4x1xf32>
    %147 = arith.addf %143, %146 : vector<4x1xf32>
    %148 = math.rsqrt %147 : vector<4x1xf32>
    %149 = vector.broadcast %148 : vector<4x1xf32> to vector<4x32xf32>
    %150 = arith.mulf %145, %149 : vector<4x32xf32>
    %151 = vector.broadcast %129 : vector<1x32xf32> to vector<4x32xf32>
    %152 = arith.mulf %150, %151 : vector<4x32xf32>
    %153 = vector.broadcast %130 : vector<1x32xf32> to vector<4x32xf32>
    %154 = arith.addf %152, %153 : vector<4x32xf32>
    %155 = tpu.concatenate %128, %154 in 1 : vector<4x32xf32>, vector<4x32xf32> -> vector<4x64xf32>
    %c0_38 = arith.constant 0 : index
    %c0_39 = arith.constant 0 : index
    %156 = vector.load %arg8[%c0_38, %c0_39] : memref<4x64xf32, #tpu.memory_space<vmem>>, vector<4x64xf32>
    tpu.vector_store %arg8[%c0_38, %c0_39], %155 {strides = array<i32>} : memref<4x64xf32, #tpu.memory_space<vmem>>, vector<4x64xf32>,
    return
  }
}

</mosaic_0001>

<llo_original>
// kernel: attn_inference_net_lstm_cell.1
$region0: #{attn_inference_net_lstm_cell.1}
  #allocation0 [shape = 'u32[]', space=smem, size = 0x4, offset = 0x4, fixed_abs, tag = 'smem constant byte address 0x4 - core index']
  #allocation1 [shape = 'u32[144,128]{1,0:T(1,128)}', space=vmem, size = 0x12000, scoped, tag = 'internal scratch']
  %s0 = inlined_call_operand.vmem [shape: f32[4,64], index: 0, kind: input, shape index: {}, may-alias: {0,8}]
  %s1 = inlined_call_operand.hbm [shape: f32[8,32], index: 1, kind: input, shape index: {}]
  %s2 = inlined_call_operand.hbm [shape: f32[4,24], index: 2, kind: input, shape index: {}]
  %s3 = inlined_call_operand.hbm [shape: bf16[32,160], index: 3, kind: input, shape index: {}]
  %s4 = inlined_call_operand.hbm [shape: bf16[32,64], index: 4, kind: input, shape index: {}]
  %s5 = inlined_call_operand.hbm [shape: bf16[32,80], index: 5, kind: input, shape index: {}]
  %s6 = inlined_call_operand.vmem [shape: bf16[72,128], index: 6, kind: input, shape index: {}]
  %s7 = inlined_call_operand.vmem [shape: f32[6,128], index: 7, kind: input, shape index: {}]
  %s8 = inlined_call_operand.vmem [shape: f32[4,64], index: 8, kind: output, shape index: {}, may-alias: {0,8}]
  %s9 = sld [smem:[#allocation0]]
  $region62: #{attn_inference_net_lstm_cell.1} parent=0
    _
  %s11 = ssub.s32 1, %s9
  %s12 = scalar_select 0, %s11, %s9
  $region1: #{attn_inference_net_lstm_cell.1} parent=0
    #allocation2 [shape = 'u8[4096]{0}', space=vmem, size = 0x1000, scoped, tag = 'input window, operand 1, single buffered']
    #allocation3 [shape = 's32[1]{0}', space=sflag, size = 0x4, scoped, tag = 'scoped memory for attn_inference_net_lstm_cell.1']
    #allocation4 [shape = 'u8[2048]{0}', space=vmem, size = 0x800, scoped, tag = 'input window, operand 2, single buffered']
    #allocation5 [shape = 's32[1]{0}', space=sflag, size = 0x4, scoped, tag = 'scoped memory for attn_inference_net_lstm_cell.1']
    #allocation6 [shape = 'u8[16384]{0}', space=vmem, size = 0x4000, scoped, tag = 'input window, operand 3, single buffered']
    #allocation7 [shape = 'u8[8192]{0}', space=vmem, size = 0x2000, scoped, tag = 'input window, operand 4, single buffered']
    #allocation8 [shape = 's32[1]{0}', space=sflag, size = 0x4, scoped, tag = 'scoped memory for attn_inference_net_lstm_cell.1']
    #allocation9 [shape = 'u8[8192]{0}', space=vmem, size = 0x2000, scoped, tag = 'input window, operand 5, single buffered']
    %13 = vsyncpa [#allocation3], 0
    %14 = vsyncpa [#allocation5], 0
    %15 = vsyncpa [#allocation8], 0
    // Predicated region
    $region2: #{attn_inference_net_lstm_cell.1} parent=1 // pred_check
      _
    $region3: #{attn_inference_net_lstm_cell.1} parent=1 // pred_check_branch
      %17 = sbr.rel (0) target = $region5
    $region4: #{attn_inference_net_lstm_cell.1} parent=1 // pred_region
      _
    $region5: #{attn_inference_net_lstm_cell.1} parent=1 // pred_fallthru
      _
    // Predicated region
    $region6: #{attn_inference_net_lstm_cell.1} parent=1 // pred_check
      _
    $region7: #{attn_inference_net_lstm_cell.1} parent=1 // pred_check_branch
      %19 = sbr.rel (0) target = $region9
    $region8: #{attn_inference_net_lstm_cell.1} parent=1 // pred_region
      %s21 = ssub.s32 128, 128
      %22 = vsyncadd [#allocation3], %s21
      %s24 = sshll.u32 [#allocation2], 4
      %s25 = int_to_ptr.vmem [resolvable:$true] %s24
      %27 = dma.hbm_to_vmem [thread:$0]  %s1, 128, %s25, [#allocation3]
    $region9: #{attn_inference_net_lstm_cell.1} parent=1 // pred_fallthru
      _
    // Predicated region
    $region10: #{attn_inference_net_lstm_cell.1} parent=1 // pred_check
      _
    $region11: #{attn_inference_net_lstm_cell.1} parent=1 // pred_check_branch
      %29 = sbr.rel (0) target = $region13
    $region12: #{attn_inference_net_lstm_cell.1} parent=1 // pred_region
      %s31 = ssub.s32 64, 64
      %32 = vsyncadd [#allocation5], %s31
      %s34 = sshll.u32 [#allocation4], 4
      %s35 = int_to_ptr.vmem [resolvable:$true] %s34
      %37 = dma.hbm_to_vmem [thread:$0]  %s2, 64, %s35, [#allocation5]
    $region13: #{attn_inference_net_lstm_cell.1} parent=1 // pred_fallthru
      _
    // Predicated region
    $region14: #{attn_inference_net_lstm_cell.1} parent=1 // pred_check
      _
    $region15: #{attn_inference_net_lstm_cell.1} parent=1 // pred_check_branch
      %39 = sbr.rel (0) target = $region17
    $region16: #{attn_inference_net_lstm_cell.1} parent=1 // pred_region
      %s41 = ssub.s32 512, 512
      %42 = vsyncadd [#allocation5], %s41
      %s43 = sshll.u32 [#allocation6], 4
      %s44 = int_to_ptr.vmem [resolvable:$true] %s43
      %49 = dma.hbm_to_vmem [thread:$0]  %s3, 512, %s44, [#allocation5], 128, 128, 8
    $region17: #{attn_inference_net_lstm_cell.1} parent=1 // pred_fallthru
      _
    // Predicated region
    $region18: #{attn_inference_net_lstm_cell.1} parent=1 // pred_check
      _
    $region19: #{attn_inference_net_lstm_cell.1} parent=1 // pred_check_branch
      %51 = sbr.rel (0) target = $region21
    $region20: #{attn_inference_net_lstm_cell.1} parent=1 // pred_region
      %s53 = ssub.s32 256, 256
      %54 = vsyncadd [#allocation8], %s53
      %s55 = sshll.u32 [#allocation7], 4
      %s56 = int_to_ptr.vmem [resolvable:$true] %s55
      %61 = dma.hbm_to_vmem [thread:$0]  %s4, 256, %s56, [#allocation8], 64, 64, 4
    $region21: #{attn_inference_net_lstm_cell.1} parent=1 // pred_fallthru
      _
    // Predicated region
    $region22: #{attn_inference_net_lstm_cell.1} parent=1 // pred_check
      _
    $region23: #{attn_inference_net_lstm_cell.1} parent=1 // pred_check_branch
      %63 = sbr.rel (0) target = $region25
    $region24: #{attn_inference_net_lstm_cell.1} parent=1 // pred_region
      %s65 = ssub.s32 256, 256
      %66 = vsyncadd [#allocation8], %s65
      %s67 = sshll.u32 [#allocation9], 4
      %s68 = int_to_ptr.vmem [resolvable:$true] %s67
      %73 = dma.hbm_to_vmem [thread:$0]  %s5, 256, %s68, [#allocation8], 64, 64, 4
    $region25: #{attn_inference_net_lstm_cell.1} parent=1 // pred_fallthru
      _
    // Predicated region
    $region26: #{attn_inference_net_lstm_cell.1} parent=1 // pred_check
      _
    $region27: #{attn_inference_net_lstm_cell.1} parent=1 // pred_check_branch
      %75 = sbr.rel (0) target = $region29
    $region28: #{attn_inference_net_lstm_cell.1} parent=1 // pred_region
      _
    $region29: #{attn_inference_net_lstm_cell.1} parent=1 // pred_fallthru
      _
    // Predicated region
    $region30: #{attn_inference_net_lstm_cell.1} parent=1 // pred_check
      _
    $region31: #{attn_inference_net_lstm_cell.1} parent=1 // pred_check_branch
      %77 = sbr.rel (0) target = $region33
    $region32: #{attn_inference_net_lstm_cell.1} parent=1 // pred_region
      _
    $region33: #{attn_inference_net_lstm_cell.1} parent=1 // pred_fallthru
      _
    // Predicated region
    $region34: #{attn_inference_net_lstm_cell.1} parent=1 // pred_check
      _
    $region35: #{attn_inference_net_lstm_cell.1} parent=1 // pred_check_branch
      %79 = sbr.rel (0) target = $region37
    $region36: #{attn_inference_net_lstm_cell.1} parent=1 // pred_region
      %80 = dma.done [#allocation3], 128
    $region37: #{attn_inference_net_lstm_cell.1} parent=1 // pred_fallthru
      _
    // Predicated region
    $region38: #{attn_inference_net_lstm_cell.1} parent=1 // pred_check
      _
    $region39: #{attn_inference_net_lstm_cell.1} parent=1 // pred_check_branch
      %82 = sbr.rel (0) target = $region41
    $region40: #{attn_inference_net_lstm_cell.1} parent=1 // pred_region
      %83 = dma.done [#allocation5], 64
    $region41: #{attn_inference_net_lstm_cell.1} parent=1 // pred_fallthru
      _
    // Predicated region
    $region42: #{attn_inference_net_lstm_cell.1} parent=1 // pred_check
      _
    $region43: #{attn_inference_net_lstm_cell.1} parent=1 // pred_check_branch
      %85 = sbr.rel (0) target = $region45
    $region44: #{attn_inference_net_lstm_cell.1} parent=1 // pred_region
      %86 = dma.done [#allocation5], 512
    $region45: #{attn_inference_net_lstm_cell.1} parent=1 // pred_fallthru
      _
    // Predicated region
    $region46: #{attn_inference_net_lstm_cell.1} parent=1 // pred_check
      _
    $region47: #{attn_inference_net_lstm_cell.1} parent=1 // pred_check_branch
      %88 = sbr.rel (0) target = $region49
    $region48: #{attn_inference_net_lstm_cell.1} parent=1 // pred_region
      %89 = dma.done [#allocation8], 256
    $region49: #{attn_inference_net_lstm_cell.1} parent=1 // pred_fallthru
      _
    // Predicated region
    $region50: #{attn_inference_net_lstm_cell.1} parent=1 // pred_check
      _
    $region51: #{attn_inference_net_lstm_cell.1} parent=1 // pred_check_branch
      %91 = sbr.rel (0) target = $region53
    $region52: #{attn_inference_net_lstm_cell.1} parent=1 // pred_region
      %92 = dma.done [#allocation8], 256
    $region53: #{attn_inference_net_lstm_cell.1} parent=1 // pred_fallthru
      _
    %v94 = vld [vmem:[%s0] sm:$0xf]
    %v95 = vld [vmem:[#allocation2] sm:$0xff]
    %v96 = vld [vmem:[#allocation4] sm:$0xf]
    %v97 = vld [vmem:[%s7] sm:$0x3f]
    %v98 = vpack.c.bf16 %v94, %v94
    %v99 = vld [vmem:[#allocation6] sm:$0xff]
    %v100 = vld [vmem:[#allocation6 + $0x8] sm:$0xff]
    %v101 = vld [vmem:[#allocation6 + $0x10] sm:$0xff]
    %v102 = vld [vmem:[#allocation6 + $0x18] sm:$0xff]
    %v107 = vunpack.c.l.b16 %v99
    %v108 = vunpack.c.h.b16 %v99
    %v109 = vunpack.c.l.b16 %v100
    %v110 = vunpack.c.h.b16 %v100
    %v111 = vunpack.c.l.b16 %v101
    %v112 = vunpack.c.h.b16 %v101
    %v113 = vunpack.c.l.b16 %v102
    %v114 = vunpack.c.h.b16 %v102
    %v115 = vpack.c.b16 %v109, %v107
    %v116 = vpack.c.b16 %v110, %v108
    %v117 = vpack.c.b16 %v113, %v111
    %v118 = vpack.c.b16 %v114, %v112
    %vm123 = vcmask 261120
    %v125 = vsel %vm123, %v98, 0
    %127 = vmatprep.subr.bf16.mxu0 %v116
    %128 = vmatpush1.bf16.msra.mxu0 %v115
    %129 = vmatprep.subr.bf16.mxu0 %v118
    %130 = vmatpush1.bf16.msra.mxu0 %v117
    %131 = vmatprep.subr.bf16.mxu0 0
    %132 = vmatpush1.bf16.msra.mxu0 0
    %133 = vmatprep.subr.bf16.mxu0 0
    %134 = vmatpush1.bf16.msra.mxu0 0
    %135 = vmatprep.subr.bf16.mxu0 0
    %136 = vmatpush1.bf16.msra.mxu0 0
    %137 = vmatprep.subr.bf16.mxu0 0
    %138 = vmatpush1.bf16.msra.mxu0 0
    %139 = vmatprep.subr.bf16.mxu0 0
    %140 = vmatpush1.bf16.msra.mxu0 0
    %141 = vmatprep.subr.bf16.mxu0 0
    %142 = vmatpush1.bf16.msra.mxu0 0
    %143 = vmatprep.subr.bf16.mxu0 0
    %144 = vmatpush1.bf16.msra.mxu0 0
    %145 = vmatprep.subr.bf16.mxu0 0
    %146 = vmatpush1.bf16.msra.mxu0 0
    %147 = vmatprep.subr.bf16.mxu0 0
    %148 = vmatpush1.bf16.msra.mxu0 0
    %149 = vmatprep.subr.bf16.mxu0 0
    %150 = vmatpush1.bf16.msra.mxu0 0
    %151 = vmatprep.subr.bf16.mxu0 0
    %152 = vmatpush1.bf16.msra.mxu0 0
    %153 = vmatprep.subr.bf16.mxu0 0
    %154 = vmatpush1.bf16.msra.mxu0 0
    %155 = vmatprep.subr.bf16.mxu0 0
    %156 = vmatpush1.bf16.msra.mxu0 0
    %157 = vmatprep.subr.bf16.mxu0 0
    %158 = vmatpush1.bf16.msra.mxu0 0
    %159 = vmatprep.mubr.bf16.mxu0 0
    %160 = vmatmul.mubr.bf16.gmra.mrb[0].mxu0 %v125
    %v161 = vpop.f32.mrb[0].mxu0
    %v162 = vadd.f32 0.0, %v161
    %v163 = vpop.f32.mrb[0].mxu0
    %v164 = vadd.f32 0.0, %v163
    %v165 = vpop.f32.mrb[0].mxu0
    %v166 = vpop.f32.mrb[0].mxu0
    %167 = vdwg.mxu0
    %v168 = vlaneseq
    %v169 = vshrl.u32 %v168, 7
    %v170 = vsub.s32 0, %v169
    %v171 = vrot.slane %v97, %v170
    %v172 = vadd.f32 %v162, %v171
    %v173 = vlaneseq
    %v174 = vshrl.u32 %v173, 7
    %v175 = vsub.s32 1, %v174
    %v176 = vrot.slane %v97, %v175
    %v177 = vadd.f32 %v164, %v176
    %v178 = vpack.c.bf16 %v95, %v95
    %v179 = vld [vmem:[#allocation7] sm:$0xf]
    %v180 = vld [vmem:[#allocation7 + $0x4] sm:$0xf]
    %v181 = vld [vmem:[#allocation7 + $0x8] sm:$0xf]
    %v182 = vld [vmem:[#allocation7 + $0xc] sm:$0xf]
    %v187 = vunpack.c.l.b16 %v179
    %v188 = vunpack.c.l.b16 %v180
    %v189 = vunpack.c.l.b16 %v181
    %v190 = vunpack.c.l.b16 %v182
    %v191 = vpack.c.b16 %v188, %v187
    %v192 = vpack.c.b16 %v190, %v189
    %v196 = vsel %vm123, %v178, 0
    %198 = vmatprep.subr.bf16.mxu0 0
    %199 = vmatpush1.bf16.msra.mxu0 %v191
    %200 = vmatprep.subr.bf16.mxu0 0
    %201 = vmatpush1.bf16.msra.mxu0 %v192
    %202 = vmatprep.subr.bf16.mxu0 0
    %203 = vmatpush1.bf16.msra.mxu0 0
    %204 = vmatprep.subr.bf16.mxu0 0
    %205 = vmatpush1.bf16.msra.mxu0 0
    %206 = vmatprep.subr.bf16.mxu0 0
    %207 = vmatpush1.bf16.msra.mxu0 0
    %208 = vmatprep.subr.bf16.mxu0 0
    %209 = vmatpush1.bf16.msra.mxu0 0
    %210 = vmatprep.subr.bf16.mxu0 0
    %211 = vmatpush1.bf16.msra.mxu0 0
    %212 = vmatprep.subr.bf16.mxu0 0
    %213 = vmatpush1.bf16.msra.mxu0 0
    %214 = vmatprep.subr.bf16.mxu0 0
    %215 = vmatpush1.bf16.msra.mxu0 0
    %216 = vmatprep.subr.bf16.mxu0 0
    %217 = vmatpush1.bf16.msra.mxu0 0
    %218 = vmatprep.subr.bf16.mxu0 0
    %219 = vmatpush1.bf16.msra.mxu0 0
    %220 = vmatprep.subr.bf16.mxu0 0
    %221 = vmatpush1.bf16.msra.mxu0 0
    %222 = vmatprep.subr.bf16.mxu0 0
    %223 = vmatpush1.bf16.msra.mxu0 0
    %224 = vmatprep.subr.bf16.mxu0 0
    %225 = vmatpush1.bf16.msra.mxu0 0
    %226 = vmatprep.subr.bf16.mxu0 0
    %227 = vmatpush1.bf16.msra.mxu0 0
    %228 = vmatprep.subr.bf16.mxu0 0
    %229 = vmatpush1.bf16.msra.mxu0 0
    %230 = vmatprep.mubr.bf16.mxu0 0
    %231 = vmatmul.mubr.bf16.gmra.mrb[0].mxu0 %v196
    %v232 = vpop.f32.mrb[0].mxu0
    %v233 = vadd.f32 0.0, %v232
    %v234 = vpop.f32.mrb[0].mxu0
    %v235 = vpop.f32.mrb[0].mxu0
    %v236 = vpop.f32.mrb[0].mxu0
    %237 = vdwg.mxu0
    %239 = vrot.lane.b32.xlu0 %v176, 96
    %v240 = vpop.permute.xlu0 %239
    %v242 = vadd.f32 %v233, %v240
    %v244 = vsel %vm123, %v177, 0
    %v247 = vsel %vm123, %v242, 0
    %249 = vmatprep.subr.mxu0 0.0
    %250 = vmatpush1.xpose.msra.mxu0 %v247
    %251 = vmatprep.subr.mxu0 0.0
    %252 = vmatpush1.xpose.msra.mxu0 0.0
    %253 = vmatprep.subr.mxu0 0.0
    %254 = vmatpush1.xpose.msra.mxu0 0.0
    %255 = vmatprep.subr.mxu0 0.0
    %256 = vmatpush1.xpose.msra.mxu0 0.0
    %257 = vmatprep.subr.mxu0 0.0
    %258 = vmatpush1.xpose.msra.mxu0 0.0
    %259 = vmatprep.subr.mxu0 0.0
    %260 = vmatpush1.xpose.msra.mxu0 0.0
    %261 = vmatprep.subr.mxu0 0.0
    %262 = vmatpush1.xpose.msra.mxu0 0.0
    %263 = vmatprep.subr.mxu0 0.0
    %264 = vmatpush1.xpose.msra.mxu0 0.0
    %265 = vmatprep.subr.mxu0 0.0
    %266 = vmatpush1.xpose.msra.mxu0 0.0
    %267 = vmatprep.subr.mxu0 0.0
    %268 = vmatpush1.xpose.msra.mxu0 0.0
    %269 = vmatprep.subr.mxu0 0.0
    %270 = vmatpush1.xpose.msra.mxu0 0.0
    %271 = vmatprep.subr.mxu0 0.0
    %272 = vmatpush1.xpose.msra.mxu0 0.0
    %273 = vmatprep.subr.mxu0 0.0
    %274 = vmatpush1.xpose.msra.mxu0 0.0
    %275 = vmatprep.subr.mxu0 0.0
    %276 = vmatpush1.xpose.msra.mxu0 0.0
    %277 = vmatprep.subr.mxu0 0.0
    %278 = vmatpush1.xpose.msra.mxu0 0.0
    %279 = vmatprep.subr.mxu0 0.0
    %280 = vmatpush1.xpose.msra.mxu0 0.0
    %281 = vmatprep.subr.mxu0 0.0
    %282 = vmatpush1.xpose.msra.mxu0 0.0
    %283 = vmatprep.subr.mxu0 0.0
    %284 = vmatpush1.xpose.msra.mxu0 0.0
    %285 = vmatprep.subr.mxu0 0.0
    %286 = vmatpush1.xpose.msra.mxu0 0.0
    %287 = vmatprep.subr.mxu0 0.0
    %288 = vmatpush1.xpose.msra.mxu0 0.0
    %289 = vmatprep.subr.mxu0 0.0
    %290 = vmatpush1.xpose.msra.mxu0 0.0
    %291 = vmatprep.subr.mxu0 0.0
    %292 = vmatpush1.xpose.msra.mxu0 0.0
    %293 = vmatprep.subr.mxu0 0.0
    %294 = vmatpush1.xpose.msra.mxu0 0.0
    %295 = vmatprep.subr.mxu0 0.0
    %296 = vmatpush1.xpose.msra.mxu0 0.0
    %297 = vmatprep.subr.mxu0 0.0
    %298 = vmatpush1.xpose.msra.mxu0 0.0
    %299 = vmatprep.subr.mxu0 0.0
    %300 = vmatpush1.xpose.msra.mxu0 0.0
    %301 = vmatprep.subr.mxu0 0.0
    %302 = vmatpush1.xpose.msra.mxu0 0.0
    %303 = vmatprep.subr.mxu0 0.0
    %304 = vmatpush1.xpose.msra.mxu0 0.0
    %305 = vmatprep.subr.mxu0 0.0
    %306 = vmatpush1.xpose.msra.mxu0 0.0
    %307 = vmatprep.subr.mxu0 0.0
    %308 = vmatpush1.xpose.msra.mxu0 0.0
    %309 = vmatprep.subr.mxu0 0.0
    %310 = vmatpush1.xpose.msra.mxu0 0.0
    %311 = vmatprep.subr.mxu0 0.0
    %312 = vmatpush1.xpose.msra.mxu0 0.0
    %313 = vmatprep.mubr.f32.mxu0 0.0
    %314 = vmatmul.mubr.f32.gmra.mrb[0].mxu0 %v244
    %v315 = vpop.f32.mrb[0].mxu0
    %v316 = vadd.f32 0.0, %v315
    %v317 = vpop.f32.mrb[0].mxu0
    %318 = vdwg.mxu0
    %v319 = vmul.f32 %v316, 0.17677669
    %vm320 = vcmask 60416
    %v321 = vsel %vm320, %v319, -inf
    %322 = vmax.xlane.f32.xlu0 %v321
    %v323 = vpop.xlane.xlu0 %322
    %v324 = vsub.f32 %v319, %v323
    %v325 = vmul.f32 %v324, 1.442695
    %v326 = vpow.pop %v325
    %v327 = vsel %vm320, %v326, 0.0
    %328 = vadd.xlane.f32.xlu0 %v327
    %v329 = vpop.xlane.xlu0 %328
    %v330 = vrcp.pop %v329
    %v331 = vmul.f32 %v326, %v330
    %332 = vrot.lane.b32.xlu0 %v242, 96
    %v333 = vpop.permute.xlu0 %332
    %vm335 = vcmask 64512
    %v337 = vsel %vm335, %v331, 0
    %339 = vmatprep.subr.mxu0 0.0
    %340 = vmatpush1.msra.mxu0 %v333
    %341 = vmatprep.subr.mxu0 0.0
    %342 = vmatpush1.msra.mxu0 0.0
    %343 = vmatprep.subr.mxu0 0.0
    %344 = vmatpush1.msra.mxu0 0.0
    %345 = vmatprep.subr.mxu0 0.0
    %346 = vmatpush1.msra.mxu0 0.0
    %347 = vmatprep.subr.mxu0 0.0
    %348 = vmatpush1.msra.mxu0 0.0
    %349 = vmatprep.subr.mxu0 0.0
    %350 = vmatpush1.msra.mxu0 0.0
    %351 = vmatprep.subr.mxu0 0.0
    %352 = vmatpush1.msra.mxu0 0.0
    %353 = vmatprep.subr.mxu0 0.0
    %354 = vmatpush1.msra.mxu0 0.0
    %355 = vmatprep.subr.mxu0 0.0
    %356 = vmatpush1.msra.mxu0 0.0
    %357 = vmatprep.subr.mxu0 0.0
    %358 = vmatpush1.msra.mxu0 0.0
    %359 = vmatprep.subr.mxu0 0.0
    %360 = vmatpush1.msra.mxu0 0.0
    %361 = vmatprep.subr.mxu0 0.0
    %362 = vmatpush1.msra.mxu0 0.0
    %363 = vmatprep.subr.mxu0 0.0
    %364 = vmatpush1.msra.mxu0 0.0
    %365 = vmatprep.subr.mxu0 0.0
    %366 = vmatpush1.msra.mxu0 0.0
    %367 = vmatprep.subr.mxu0 0.0
    %368 = vmatpush1.msra.mxu0 0.0
    %369 = vmatprep.subr.mxu0 0.0
    %370 = vmatpush1.msra.mxu0 0.0
    %371 = vmatprep.subr.mxu0 0.0
    %372 = vmatpush1.msra.mxu0 0.0
    %373 = vmatprep.subr.mxu0 0.0
    %374 = vmatpush1.msra.mxu0 0.0
    %375 = vmatprep.subr.mxu0 0.0
    %376 = vmatpush1.msra.mxu0 0.0
    %377 = vmatprep.subr.mxu0 0.0
    %378 = vmatpush1.msra.mxu0 0.0
    %379 = vmatprep.subr.mxu0 0.0
    %380 = vmatpush1.msra.mxu0 0.0
    %381 = vmatprep.subr.mxu0 0.0
    %382 = vmatpush1.msra.mxu0 0.0
    %383 = vmatprep.subr.mxu0 0.0
    %384 = vmatpush1.msra.mxu0 0.0
    %385 = vmatprep.subr.mxu0 0.0
    %386 = vmatpush1.msra.mxu0 0.0
    %387 = vmatprep.subr.mxu0 0.0
    %388 = vmatpush1.msra.mxu0 0.0
    %389 = vmatprep.subr.mxu0 0.0
    %390 = vmatpush1.msra.mxu0 0.0
    %391 = vmatprep.subr.mxu0 0.0
    %392 = vmatpush1.msra.mxu0 0.0
    %393 = vmatprep.subr.mxu0 0.0
    %394 = vmatpush1.msra.mxu0 0.0
    %395 = vmatprep.subr.mxu0 0.0
    %396 = vmatpush1.msra.mxu0 0.0
    %397 = vmatprep.subr.mxu0 0.0
    %398 = vmatpush1.msra.mxu0 0.0
    %399 = vmatprep.subr.mxu0 0.0
    %400 = vmatpush1.msra.mxu0 0.0
    %401 = vmatprep.subr.mxu0 0.0
    %402 = vmatpush1.msra.mxu0 0.0
    %403 = vmatprep.mubr.f32.mxu0 0.0
    %404 = vmatmul.mubr.f32.gmra.mrb[0].mxu0 %v337
    %v405 = vpop.f32.mrb[0].mxu0
    %v406 = vadd.f32 0.0, %v405
    %v407 = vpop.f32.mrb[0].mxu0
    %408 = vdwg.mxu0
    %v409 = vld [vmem:[#allocation9] sm:$0xf]
    %v410 = vld [vmem:[#allocation9 + $0x4] sm:$0xf]
    %v411 = vld [vmem:[#allocation9 + $0x8] sm:$0xf]
    %v412 = vld [vmem:[#allocation9 + $0xc] sm:$0xf]
    %v413 = vpack.c.bf16 %v406, %v406
    %v418 = vunpack.c.l.b16 %v409
    %v419 = vunpack.c.l.b16 %v410
    %v420 = vunpack.c.l.b16 %v411
    %v421 = vunpack.c.l.b16 %v412
    %v422 = vpack.c.b16 %v419, %v418
    %v423 = vpack.c.b16 %v421, %v420
    %426 = vrot.lane.b32.xlu0 %v176, 32
    %v427 = vpop.permute.xlu0 %426
    %v430 = vsel %vm123, %v413, 0
    %432 = vmatprep.subr.bf16.mxu0 0
    %433 = vmatpush1.bf16.msra.mxu0 %v422
    %434 = vmatprep.subr.bf16.mxu0 0
    %435 = vmatpush1.bf16.msra.mxu0 %v423
    %436 = vmatprep.subr.bf16.mxu0 0
    %437 = vmatpush1.bf16.msra.mxu0 0
    %438 = vmatprep.subr.bf16.mxu0 0
    %439 = vmatpush1.bf16.msra.mxu0 0
    %440 = vmatprep.subr.bf16.mxu0 0
    %441 = vmatpush1.bf16.msra.mxu0 0
    %442 = vmatprep.subr.bf16.mxu0 0
    %443 = vmatpush1.bf16.msra.mxu0 0
    %444 = vmatprep.subr.bf16.mxu0 0
    %445 = vmatpush1.bf16.msra.mxu0 0
    %446 = vmatprep.subr.bf16.mxu0 0
    %447 = vmatpush1.bf16.msra.mxu0 0
    %448 = vmatprep.subr.bf16.mxu0 0
    %449 = vmatpush1.bf16.msra.mxu0 0
    %450 = vmatprep.subr.bf16.mxu0 0
    %451 = vmatpush1.bf16.msra.mxu0 0
    %452 = vmatprep.subr.bf16.mxu0 0
    %453 = vmatpush1.bf16.msra.mxu0 0
    %454 = vmatprep.subr.bf16.mxu0 0
    %455 = vmatpush1.bf16.msra.mxu0 0
    %456 = vmatprep.subr.bf16.mxu0 0
    %457 = vmatpush1.bf16.msra.mxu0 0
    %458 = vmatprep.subr.bf16.mxu0 0
    %459 = vmatpush1.bf16.msra.mxu0 0
    %460 = vmatprep.subr.bf16.mxu0 0
    %461 = vmatpush1.bf16.msra.mxu0 0
    %462 = vmatprep.subr.bf16.mxu0 0
    %463 = vmatpush1.bf16.msra.mxu0 0
    %464 = vmatprep.mubr.bf16.mxu0 0
    %465 = vmatmul.mubr.bf16.gmra.mrb[0].mxu0 %v430
    %v466 = vpop.f32.mrb[0].mxu0
    %v467 = vadd.f32 %v427, %v466
    %v468 = vpop.f32.mrb[0].mxu0
    %v469 = vpop.f32.mrb[0].mxu0
    %v470 = vpop.f32.mrb[0].mxu0
    %471 = vdwg.mxu0
    %v472 = vpack.c.bf16 %v467, %v467
    %v473 = vlaneseq
    %v474 = vshrl.u32 %v473, 7
    %v475 = vsub.s32 2, %v474
    %v476 = vrot.slane %v97, %v475
    %477 = vrot.lane.b32.xlu0 %v422, 96
    %v478 = vpop.permute.xlu0 %477
    %479 = vrot.lane.b32.xlu0 %v423, 96
    %v480 = vpop.permute.xlu0 %479
    %v484 = vsel %vm123, %v472, 0
    %486 = vmatprep.subr.bf16.mxu0 0
    %487 = vmatpush1.bf16.msra.mxu0 %v478
    %488 = vmatprep.subr.bf16.mxu0 0
    %489 = vmatpush1.bf16.msra.mxu0 %v480
    %490 = vmatprep.subr.bf16.mxu0 0
    %491 = vmatpush1.bf16.msra.mxu0 0
    %492 = vmatprep.subr.bf16.mxu0 0
    %493 = vmatpush1.bf16.msra.mxu0 0
    %494 = vmatprep.subr.bf16.mxu0 0
    %495 = vmatpush1.bf16.msra.mxu0 0
    %496 = vmatprep.subr.bf16.mxu0 0
    %497 = vmatpush1.bf16.msra.mxu0 0
    %498 = vmatprep.subr.bf16.mxu0 0
    %499 = vmatpush1.bf16.msra.mxu0 0
    %500 = vmatprep.subr.bf16.mxu0 0
    %501 = vmatpush1.bf16.msra.mxu0 0
    %502 = vmatprep.subr.bf16.mxu0 0
    %503 = vmatpush1.bf16.msra.mxu0 0
    %504 = vmatprep.subr.bf16.mxu0 0
    %505 = vmatpush1.bf16.msra.mxu0 0
    %506 = vmatprep.subr.bf16.mxu0 0
    %507 = vmatpush1.bf16.msra.mxu0 0
    %508 = vmatprep.subr.bf16.mxu0 0
    %509 = vmatpush1.bf16.msra.mxu0 0
    %510 = vmatprep.subr.bf16.mxu0 0
    %511 = vmatpush1.bf16.msra.mxu0 0
    %512 = vmatprep.subr.bf16.mxu0 0
    %513 = vmatpush1.bf16.msra.mxu0 0
    %514 = vmatprep.subr.bf16.mxu0 0
    %515 = vmatpush1.bf16.msra.mxu0 0
    %516 = vmatprep.subr.bf16.mxu0 0
    %517 = vmatpush1.bf16.msra.mxu0 0
    %518 = vmatprep.mubr.bf16.mxu0 0
    %519 = vmatmul.mubr.bf16.gmra.mrb[0].mxu0 %v484
    %v520 = vpop.f32.mrb[0].mxu0
    %v521 = vadd.f32 %v476, %v520
    %v522 = vpop.f32.mrb[0].mxu0
    %v523 = vpop.f32.mrb[0].mxu0
    %v524 = vpop.f32.mrb[0].mxu0
    %525 = vdwg.mxu0
    %v526 = vld [vmem:[%s6] sm:$0xf]
    %v527 = vld [vmem:[%s6 + $0x4] sm:$0xf]
    %v528 = vld [vmem:[%s6 + $0x8] sm:$0xf]
    %v529 = vld [vmem:[%s6 + $0xc] sm:$0xf]
    %v530 = vld [vmem:[%s6 + $0x10] sm:$0xf]
    %v531 = vld [vmem:[%s6 + $0x14] sm:$0xf]
    %v532 = vld [vmem:[%s6 + $0x18] sm:$0xf]
    %v533 = vld [vmem:[%s6 + $0x1c] sm:$0xf]
    %v534 = vld [vmem:[%s6 + $0x20] sm:$0xf]
    %v535 = vpack.c.bf16 %v521, %v521
    %v538 = vunpack.c.l.b16 %v526
    %v539 = vunpack.c.l.b16 %v527
    %v540 = vpack.c.b16 %v539, %v538
    %vm542 = vcmask 130048
    %v544 = vsel %vm542, %v535, 0
    %546 = vmatprep.subr.bf16.mxu0 0
    %547 = vmatpush1.bf16.msra.mxu0 %v540
    %548 = vmatprep.subr.bf16.mxu0 0
    %549 = vmatpush1.bf16.msra.mxu0 0
    %550 = vmatprep.subr.bf16.mxu0 0
    %551 = vmatpush1.bf16.msra.mxu0 0
    %552 = vmatprep.subr.bf16.mxu0 0
    %553 = vmatpush1.bf16.msra.mxu0 0
    %554 = vmatprep.subr.bf16.mxu0 0
    %555 = vmatpush1.bf16.msra.mxu0 0
    %556 = vmatprep.subr.bf16.mxu0 0
    %557 = vmatpush1.bf16.msra.mxu0 0
    %558 = vmatprep.subr.bf16.mxu0 0
    %559 = vmatpush1.bf16.msra.mxu0 0
    %560 = vmatprep.subr.bf16.mxu0 0
    %561 = vmatpush1.bf16.msra.mxu0 0
    %562 = vmatprep.subr.bf16.mxu0 0
    %563 = vmatpush1.bf16.msra.mxu0 0
    %564 = vmatprep.subr.bf16.mxu0 0
    %565 = vmatpush1.bf16.msra.mxu0 0
    %566 = vmatprep.subr.bf16.mxu0 0
    %567 = vmatpush1.bf16.msra.mxu0 0
    %568 = vmatprep.subr.bf16.mxu0 0
    %569 = vmatpush1.bf16.msra.mxu0 0
    %570 = vmatprep.subr.bf16.mxu0 0
    %571 = vmatpush1.bf16.msra.mxu0 0
    %572 = vmatprep.subr.bf16.mxu0 0
    %573 = vmatpush1.bf16.msra.mxu0 0
    %574 = vmatprep.subr.bf16.mxu0 0
    %575 = vmatpush1.bf16.msra.mxu0 0
    %576 = vmatprep.subr.bf16.mxu0 0
    %577 = vmatpush1.bf16.msra.mxu0 0
    %578 = vmatprep.mubr.bf16.mxu0 0
    %579 = vmatmul.mubr.bf16.gmra.mrb[0].mxu0 %v544
    %v580 = vpop.f32.mrb[0].mxu0
    %v581 = vadd.f32 0.0, %v580
    %v582 = vpop.f32.mrb[0].mxu0
    %v583 = vpop.f32.mrb[0].mxu0
    %v584 = vpop.f32.mrb[0].mxu0
    %585 = vdwg.mxu0
    %587 = vrot.lane.b32.xlu0 %v535, 112
    %v588 = vpop.permute.xlu0 %587
    %v591 = vunpack.c.l.b16 %v528
    %v592 = vunpack.c.l.b16 %v529
    %v593 = vpack.c.b16 %v592, %v591
    %v596 = vsel %vm542, %v588, 0
    %598 = vmatprep.subr.bf16.mxu0 0
    %599 = vmatpush1.bf16.msra.mxu0 %v593
    %600 = vmatprep.subr.bf16.mxu0 0
    %601 = vmatpush1.bf16.msra.mxu0 0
    %602 = vmatprep.subr.bf16.mxu0 0
    %603 = vmatpush1.bf16.msra.mxu0 0
    %604 = vmatprep.subr.bf16.mxu0 0
    %605 = vmatpush1.bf16.msra.mxu0 0
    %606 = vmatprep.subr.bf16.mxu0 0
    %607 = vmatpush1.bf16.msra.mxu0 0
    %608 = vmatprep.subr.bf16.mxu0 0
    %609 = vmatpush1.bf16.msra.mxu0 0
    %610 = vmatprep.subr.bf16.mxu0 0
    %611 = vmatpush1.bf16.msra.mxu0 0
    %612 = vmatprep.subr.bf16.mxu0 0
    %613 = vmatpush1.bf16.msra.mxu0 0
    %614 = vmatprep.subr.bf16.mxu0 0
    %615 = vmatpush1.bf16.msra.mxu0 0
    %616 = vmatprep.subr.bf16.mxu0 0
    %617 = vmatpush1.bf16.msra.mxu0 0
    %618 = vmatprep.subr.bf16.mxu0 0
    %619 = vmatpush1.bf16.msra.mxu0 0
    %620 = vmatprep.subr.bf16.mxu0 0
    %621 = vmatpush1.bf16.msra.mxu0 0
    %622 = vmatprep.subr.bf16.mxu0 0
    %623 = vmatpush1.bf16.msra.mxu0 0
    %624 = vmatprep.subr.bf16.mxu0 0
    %625 = vmatpush1.bf16.msra.mxu0 0
    %626 = vmatprep.subr.bf16.mxu0 0
    %627 = vmatpush1.bf16.msra.mxu0 0
    %628 = vmatprep.subr.bf16.mxu0 0
    %629 = vmatpush1.bf16.msra.mxu0 0
    %630 = vmatprep.mubr.bf16.mxu0 0
    %631 = vmatmul.mubr.bf16.gmra.mrb[0].mxu0 %v596
    %v632 = vpop.f32.mrb[0].mxu0
    %v633 = vadd.f32 0.0, %v632
    %v634 = vpop.f32.mrb[0].mxu0
    %v635 = vpop.f32.mrb[0].mxu0
    %v636 = vpop.f32.mrb[0].mxu0
    %637 = vdwg.mxu0
    %v638 = vlaneseq
    %v639 = vshrl.u32 %v638, 7
    %v640 = vsub.s32 3, %v639
    %v641 = vrot.slane %v97, %v640
    %642 = vrot.lane.b32.xlu0 %v535, 96
    %v643 = vpop.permute.xlu0 %642
    %v646 = vunpack.c.l.b16 %v530
    %v647 = vunpack.c.l.b16 %v531
    %v648 = vpack.c.b16 %v647, %v646
    %v651 = vsel %vm542, %v643, 0
    %653 = vmatprep.subr.bf16.mxu0 0
    %654 = vmatpush1.bf16.msra.mxu0 %v648
    %655 = vmatprep.subr.bf16.mxu0 0
    %656 = vmatpush1.bf16.msra.mxu0 0
    %657 = vmatprep.subr.bf16.mxu0 0
    %658 = vmatpush1.bf16.msra.mxu0 0
    %659 = vmatprep.subr.bf16.mxu0 0
    %660 = vmatpush1.bf16.msra.mxu0 0
    %661 = vmatprep.subr.bf16.mxu0 0
    %662 = vmatpush1.bf16.msra.mxu0 0
    %663 = vmatprep.subr.bf16.mxu0 0
    %664 = vmatpush1.bf16.msra.mxu0 0
    %665 = vmatprep.subr.bf16.mxu0 0
    %666 = vmatpush1.bf16.msra.mxu0 0
    %667 = vmatprep.subr.bf16.mxu0 0
    %668 = vmatpush1.bf16.msra.mxu0 0
    %669 = vmatprep.subr.bf16.mxu0 0
    %670 = vmatpush1.bf16.msra.mxu0 0
    %671 = vmatprep.subr.bf16.mxu0 0
    %672 = vmatpush1.bf16.msra.mxu0 0
    %673 = vmatprep.subr.bf16.mxu0 0
    %674 = vmatpush1.bf16.msra.mxu0 0
    %675 = vmatprep.subr.bf16.mxu0 0
    %676 = vmatpush1.bf16.msra.mxu0 0
    %677 = vmatprep.subr.bf16.mxu0 0
    %678 = vmatpush1.bf16.msra.mxu0 0
    %679 = vmatprep.subr.bf16.mxu0 0
    %680 = vmatpush1.bf16.msra.mxu0 0
    %681 = vmatprep.subr.bf16.mxu0 0
    %682 = vmatpush1.bf16.msra.mxu0 0
    %683 = vmatprep.subr.bf16.mxu0 0
    %684 = vmatpush1.bf16.msra.mxu0 0
    %685 = vmatprep.mubr.bf16.mxu0 0
    %686 = vmatmul.mubr.bf16.gmra.mrb[0].mxu0 %v651
    %v687 = vpop.f32.mrb[0].mxu0
    %v688 = vadd.f32 %v641, %v687
    %v689 = vpop.f32.mrb[0].mxu0
    %v690 = vpop.f32.mrb[0].mxu0
    %v691 = vpop.f32.mrb[0].mxu0
    %692 = vdwg.mxu0
    %v693 = vpack.c.bf16 %v96, %v96
    %v694 = vlaneseq
    %v695 = vshrl.u32 %v694, 7
    %v696 = vsub.s32 4, %v695
    %v697 = vrot.slane %v97, %v696
    %v701 = vunpack.c.l.b16 %v532
    %v702 = vunpack.c.l.b16 %v533
    %v703 = vunpack.c.l.b16 %v534
    %v704 = vpack.c.b16 %v702, %v701
    %v705 = vpack.c.b16 %v703, %v703
    %vm707 = vcmask 195584
    %v709 = vsel %vm707, %v693, 0
    %vm711 = vcmask 1043456
    %v713 = vsel %vm711, %v705, 0
    %715 = vmatprep.subr.bf16.mxu0 0
    %716 = vmatpush1.bf16.msra.mxu0 %v704
    %717 = vmatprep.subr.bf16.mxu0 0
    %718 = vmatpush1.bf16.msra.mxu0 %v713
    %719 = vmatprep.subr.bf16.mxu0 0
    %720 = vmatpush1.bf16.msra.mxu0 0
    %721 = vmatprep.subr.bf16.mxu0 0
    %722 = vmatpush1.bf16.msra.mxu0 0
    %723 = vmatprep.subr.bf16.mxu0 0
    %724 = vmatpush1.bf16.msra.mxu0 0
    %725 = vmatprep.subr.bf16.mxu0 0
    %726 = vmatpush1.bf16.msra.mxu0 0
    %727 = vmatprep.subr.bf16.mxu0 0
    %728 = vmatpush1.bf16.msra.mxu0 0
    %729 = vmatprep.subr.bf16.mxu0 0
    %730 = vmatpush1.bf16.msra.mxu0 0
    %731 = vmatprep.subr.bf16.mxu0 0
    %732 = vmatpush1.bf16.msra.mxu0 0
    %733 = vmatprep.subr.bf16.mxu0 0
    %734 = vmatpush1.bf16.msra.mxu0 0
    %735 = vmatprep.subr.bf16.mxu0 0
    %736 = vmatpush1.bf16.msra.mxu0 0
    %737 = vmatprep.subr.bf16.mxu0 0
    %738 = vmatpush1.bf16.msra.mxu0 0
    %739 = vmatprep.subr.bf16.mxu0 0
    %740 = vmatpush1.bf16.msra.mxu0 0
    %741 = vmatprep.subr.bf16.mxu0 0
    %742 = vmatpush1.bf16.msra.mxu0 0
    %743 = vmatprep.subr.bf16.mxu0 0
    %744 = vmatpush1.bf16.msra.mxu0 0
    %745 = vmatprep.subr.bf16.mxu0 0
    %746 = vmatpush1.bf16.msra.mxu0 0
    %747 = vmatprep.mubr.bf16.mxu0 0
    %748 = vmatmul.mubr.bf16.gmra.mrb[0].mxu0 %v709
    %v749 = vpop.f32.mrb[0].mxu0
    %v750 = vadd.f32 %v697, %v749
    %v751 = vpop.f32.mrb[0].mxu0
    %v752 = vpop.f32.mrb[0].mxu0
    %v753 = vpop.f32.mrb[0].mxu0
    %754 = vdwg.mxu0
    %v755 = vmul.f32 %v581, %v172
    %v756 = vmul.f32 %v633, %v750
    %v757 = vadd.f32 %v755, %v756
    %v758 = vadd.f32 %v757, %v688
    %v759 = vlaneseq
    %v760 = vand.u32 %v759, 127
    %vm761 = vcmp.ge.s32.totalorder %v760, 64
    %vm762 = vcmp.lt.s32.totalorder %v760, 96
    %vm763 = vmand %vm761, %vm762
    %v764 = vtanh.pop %v758
    %v765 = vxor.u32 %v758, 2147483648
    %v766 = vmul.f32 %v765, 1.442695
    %v767 = vpow.pop %v766
    %v768 = vadd.f32 %v767, 1.0
    %v769 = vrcp.pop %v768
    %v770 = vmul.f32 1.0, %v769
    %v771 = vsel %vm763, %v764, %v770
    %v772 = vmul.f32 %v771, %v94
    %774 = vrot.lane.b32.xlu0 %v771, 64
    %v775 = vpop.permute.xlu0 %774
    %v777 = vmul.f32 %v771, %v775
    %779 = vrot.lane.b32.xlu0 %v777, 32
    %v780 = vpop.permute.xlu0 %779
    %v782 = vadd.f32 %v772, %v780
    %v783 = vtanh.pop %v782
    %785 = vrot.lane.b32.xlu0 %v783, 64
    %v786 = vpop.permute.xlu0 %785
    %v788 = vmul.f32 %v771, %v786
    %790 = vrot.lane.b32.xlu0 %v788, 32
    %v791 = vpop.permute.xlu0 %790
    %vm793 = vcmask 257024
    %v794 = vsel %vm793, %v791, 0.0
    %795 = vadd.xlane.f32.xlu0 %v794
    %v796 = vpop.xlane.xlu0 %795
    %v797 = vrcp.pop 32.0
    %v798 = vmul.f32 %v796, %v797
    %v799 = vsub.f32 %v788, %v798
    %v800 = vmul.f32 %v799, %v799
    %802 = vrot.lane.b32.xlu0 %v800, 32
    %v803 = vpop.permute.xlu0 %802
    %v805 = vsel %vm793, %v803, 0.0
    %806 = vadd.xlane.f32.xlu0 %v805
    %v807 = vpop.xlane.xlu0 %806
    %v808 = vmul.f32 %v807, %v797
    %v809 = vadd.f32 %v808, 1e-05
    %v810 = vrsqrt.pop %v809
    %v811 = vmul.f32 %v799, %v810
    %v812 = vlaneseq
    %v813 = vshrl.u32 %v812, 7
    %v814 = vsub.s32 5, %v813
    %v815 = vrot.slane %v97, %v814
    %817 = vrot.lane.b32.xlu0 %v815, 96
    %v818 = vpop.permute.xlu0 %817
    %v820 = vmul.f32 %v811, %v818
    %821 = vrot.lane.b32.xlu0 %v815, 64
    %v822 = vpop.permute.xlu0 %821
    %v824 = vadd.f32 %v820, %v822
    %826 = vrot.lane.b32.xlu0 %v782, 96
    %v827 = vpop.permute.xlu0 %826
    %v829 = vsel %vm793, %v827, 0.0
    %830 = vadd.xlane.f32.xlu0 %v829
    %v831 = vpop.xlane.xlu0 %830
    %v832 = vmul.f32 %v831, %v797
    %v833 = vsub.f32 %v782, %v832
    %v834 = vmul.f32 %v833, %v833
    %836 = vrot.lane.b32.xlu0 %v834, 96
    %v837 = vpop.permute.xlu0 %836
    %v839 = vsel %vm793, %v837, 0.0
    %840 = vadd.xlane.f32.xlu0 %v839
    %v841 = vpop.xlane.xlu0 %840
    %v842 = vmul.f32 %v841, %v797
    %v843 = vadd.f32 %v842, 1e-05
    %v844 = vrsqrt.pop %v843
    %v845 = vmul.f32 %v833, %v844
    %v846 = vmul.f32 %v845, %v818
    %v847 = vadd.f32 %v846, %v822
    %849 = vrot.lane.b32.xlu0 %v824, 32
    %v850 = vpop.permute.xlu0 %849
    %v852 = vsel %vm123, %v850, %v847
    %vm853 = vcmask 519168
    %854 = vst.msk [vmem:[%s8] sm:$0xf] %vm853, %v852
    // Predicated region
    $region54: #{attn_inference_net_lstm_cell.1} parent=1 // pred_check
      _
    $region55: #{attn_inference_net_lstm_cell.1} parent=1 // pred_check_branch
      %856 = sbr.rel (0) target = $region57
    $region56: #{attn_inference_net_lstm_cell.1} parent=1 // pred_region
      _
    $region57: #{attn_inference_net_lstm_cell.1} parent=1 // pred_fallthru
      _
    // Predicated region
    $region58: #{attn_inference_net_lstm_cell.1} parent=1 // pred_check
      _
    $region59: #{attn_inference_net_lstm_cell.1} parent=1 // pred_check_branch
      %858 = sbr.rel (0) target = $region61
    $region60: #{attn_inference_net_lstm_cell.1} parent=1 // pred_region
      _
    $region61: #{attn_inference_net_lstm_cell.1} parent=1 // pred_fallthru
      _
    %859 = vsyncpa [#allocation3], 1
    %860 = vsyncpa [#allocation5], 1
    %861 = vsyncpa [#allocation8], 1

</llo_original>
